<compile_context>
chip_gen: v5e
topology: v5e:2x2
jax: 0.10.0
libtpu: 0.0.40
codegen_flags: <defaults>
</compile_context>

<pallas_src>
import functools

import jax
import jax.numpy as jnp
from jax.experimental import pallas as pl
from jax.experimental.pallas import tpu as pltpu

A_COEF = 0.02  # self.a in the PyTorch module


def _query_box_kernel(tgt_ref, anc_ref, wT_ref, roff_ref, out_ref, *, matmul_dtype):
    """One batch-tile of the 2-chain forward, (D, batch) layout.

    tgt_ref  : (D, bm) f32  target (entity) embeddings
    anc_ref  : (D, bm) f32  anchor embeddings (enc output)
    wT_ref   : (D, D)  f32  pre-transposed relation matrix (W^T), grid-invariant
    roff_ref : (D, 1)  f32  relation offset column, grid-invariant
    out_ref  : (2, bm) f32  row 0: distance_box ; row 1: in-box flag (0./1.)
    """
    # path_dec: center = W^T @ anchor on the MXU (bf16 operands, f32 accumulate).
    wT = wT_ref[...].astype(matmul_dtype)
    anc = anc_ref[...].astype(matmul_dtype)
    center = jnp.dot(wT, anc, preferred_element_type=jnp.float32)      # (D, bm)

    # path_dec offset = zeros + rel_offset -> just the (D, 1) column, broadcast
    # across lanes inside the elementwise ops (never materialized at (D, bm)).
    offset = roff_ref[...]                                             # (D, 1)

    # dist_box (elementwise math stays f32)
    delta = jnp.abs(tgt_ref[...] - center)                             # (D, bm)
    dist_out = jnp.maximum(delta - offset, 0.0)                        # F.relu
    dist_in = jnp.minimum(delta, offset)                               # torch.min

    # L1 norms: reduce over the embedding dim (sublanes -> XLU, free slot here).
    sum_out = jnp.sum(dist_out, axis=0, keepdims=True)                 # (1, bm)
    sum_in = jnp.sum(dist_in, axis=0, keepdims=True)                   # (1, bm)

    dist = sum_out + A_COEF * sum_in
    # count_nonzero(row) == 0  <=>  sum(row) == 0  (dist_out >= 0 elementwise)
    in_box = (sum_out == 0.0).astype(jnp.float32)

    out_ref[0:1, :] = dist
    out_ref[1:2, :] = in_box


def query_box_forward(target_embeds_dB, anchor_embeds_dB, w_rel, rel_offset, *,
                      bm=None, matmul_dtype=jnp.bfloat16):
    """'2-chain' forward.  Inputs follow PyTorch's (embed_dim, batch) layout and
    stay in that layout inside the kernel (batch on lanes)."""
    D, B = target_embeds_dB.shape
    assert anchor_embeds_dB.shape == (D, B)
    assert w_rel.shape == (D, D)
    assert rel_offset.shape == (D,)

    tgt = target_embeds_dB.astype(jnp.float32)
    anc = anchor_embeds_dB.astype(jnp.float32)
    # center = W^T @ anchor  (== PyTorch's (anchor^T @ W)^T in (B, D) layout).
    # In production W^T would be stored pre-transposed; here it is one tiny
    # parameter-sized transpose per call.
    w_t = w_rel.T.astype(jnp.float32)
    roff = rel_offset.reshape(D, 1).astype(jnp.float32)

    if bm is None:
        # Large lane-aligned batch tiles; keep >=2 grid steps so both v7x
        # TensorCores stay fed.  Small batches use a single full-batch tile.
        if B % 256 == 0 and B >= 512:
            bm = 256
        elif B % 128 == 0:
            bm = 128 if B > 128 else B
        else:
            bm = B  # TODO(synk): pad ragged batches to a multiple of 128.
    assert B % bm == 0, "batch must be divisible by the batch tile"

    grid = (B // bm,)

    # VMEM budget (double-buffered batch tiles + resident W^T / offset / out).
    # Only raise the scoped limit if the default (~32 MiB) would be exceeded.
    vmem_needed = 2 * (2 * D * bm * 4) + D * D * 4 + D * 4 + 2 * (2 * bm * 4)
    vmem_limit = None
    if vmem_needed > 28 * 1024 * 1024:
        vmem_limit = min(int(vmem_needed * 1.5), 64 * 1024 * 1024)

    out = pl.pallas_call(
        functools.partial(_query_box_kernel, matmul_dtype=matmul_dtype),
        out_shape=jax.ShapeDtypeStruct((2, B), jnp.float32),
        grid_spec=pltpu.PrefetchScalarGridSpec(
            num_scalar_prefetch=0,
            grid=grid,
            in_specs=[
                pl.BlockSpec((D, bm), lambda i: (0, i)),   # target embeds (D, bm)
                pl.BlockSpec((D, bm), lambda i: (0, i)),   # anchor embeds (D, bm)
                pl.BlockSpec((D, D), lambda i: (0, 0)),    # W^T (resident)
                pl.BlockSpec((D, 1), lambda i: (0, 0)),    # relation offset (resident)
            ],
            out_specs=pl.BlockSpec((2, bm), lambda i: (0, i)),  # lane-dense slab
        ),
        compiler_params=pltpu.CompilerParams(
            dimension_semantics=("parallel",),
            vmem_limit_bytes=vmem_limit,
        ),
    )(tgt, anc, w_t, roff)

    dist = out[0]
    in_box = (out[1] > 0.5).astype(jnp.int32)
    return dist, in_box


def _reference(target_embeds_dB, anchor_embeds_dB, w_rel, rel_offset,
               dot_dtype=jnp.float32):
    """Pure-JAX reference mirroring the PyTorch code path (dot operands cast to
    dot_dtype so it matches the kernel's matmul precision)."""
    ent = target_embeds_dB.T.astype(jnp.float32)                     # entity_embedding.t()
    center = jnp.dot(w_rel.T.astype(dot_dtype),
                     anchor_embeds_dB.astype(dot_dtype),
                     preferred_element_type=jnp.float32).T           # path_dec center, .t()
    offset = jnp.zeros_like(center) + rel_offset[None, :]            # path_dec offset, .t()
    delta = jnp.abs(ent - center)
    d_out = jnp.maximum(delta - offset, 0.0)
    d_in = jnp.minimum(delta, offset)
    dist = jnp.sum(d_out, -1) + A_COEF * jnp.sum(d_in, -1)
    in_box = (jnp.count_nonzero(d_out, axis=-1) == 0).astype(jnp.int32)
    return dist, in_box


if __name__ == "__main__":
    key = jax.random.PRNGKey(0)
    D = 128          # embedding dim
    N_NODES = 32     # synthetic node-embedding table size

    k_tab_t, k_tab_a, k_w, k_off, k_src, k_anc = jax.random.split(key, 6)

    # synthetic "enc": embedding tables, (embed_dim, num_nodes)
    target_table = jax.random.normal(k_tab_t, (D, N_NODES), dtype=jnp.float32)
    anchor_table = jax.random.normal(k_tab_a, (D, N_NODES), dtype=jnp.float32)

    # synthetic path_dec parameters for the reversed relation
    w_rel = jax.random.normal(k_w, (D, D), dtype=jnp.float32) * 0.1
    rel_offset = jnp.abs(jax.random.normal(k_off, (D,), dtype=jnp.float32)) + 0.05

    # ---- test 1: small batch, f32 matmul, engineered in-box query ----------
    B1 = 16
    src1 = jax.random.randint(k_src, (B1,), 0, N_NODES)
    anc1 = jax.random.randint(k_anc, (B1,), 0, N_NODES)
    tgt_emb1 = target_table[:, src1]                                  # (D, B) like enc
    anc_emb1 = anchor_table[:, anc1]
    # place query 0's target exactly at its box center -> in_box[0] == 1
    tgt_emb1 = tgt_emb1.at[:, 0].set(w_rel.T @ anc_emb1[:, 0])

    dist1, inb1 = query_box_forward(tgt_emb1, anc_emb1, w_rel, rel_offset,
                                    matmul_dtype=jnp.float32)
    dist1 = jax.block_until_ready(dist1)
    inb1 = jax.block_until_ready(inb1)
    ref_d1, ref_i1 = _reference(tgt_emb1, anc_emb1, w_rel, rel_offset,
                                dot_dtype=jnp.float32)
    assert jnp.allclose(dist1, ref_d1, rtol=1e-3, atol=1e-2), "dist mismatch (f32)"
    assert jnp.array_equal(inb1, ref_i1), "in_box mismatch (f32)"
    assert int(inb1[0]) == 1, "engineered in-box query not detected"

    # ---- test 2: multi-tile grid (B=256 -> bm=128), bf16 MXU operands ------
    B2 = 256
    k_src2, k_anc2 = jax.random.split(jax.random.PRNGKey(1), 2)
    src2 = jax.random.randint(k_src2, (B2,), 0, N_NODES)
    anc2 = jax.random.randint(k_anc2, (B2,), 0, N_NODES)
    tgt_emb2 = target_table[:, src2]
    anc_emb2 = anchor_table[:, anc2]

    dist2, inb2 = query_box_forward(tgt_emb2, anc_emb2, w_rel, rel_offset)  # bf16 default
    dist2 = jax.block_until_ready(dist2)
    inb2 = jax.block_until_ready(inb2)
    ref_d2, ref_i2 = _reference(tgt_emb2, anc_emb2, w_rel, rel_offset,
                                dot_dtype=jnp.bfloat16)
    assert jnp.allclose(dist2, ref_d2, rtol=1e-3, atol=5e-2), "dist mismatch (bf16)"
    assert jnp.array_equal(inb2, ref_i2), "in_box mismatch (bf16)"

    # TODO(synk): '3-inter_chain' / '3-chain_inter' / 'k-inter' branches need the
    # external inter_dec_cen / inter_dec_off modules (undefined here); only the
    # chain branch is implemented.
    print("KERNEL_OK")
</pallas_src>

<mosaic_0001>
module attributes {stable_mosaic.version = 11 : i64} {
  func.func @_query_box_kernel(%arg0: i32, %arg1: memref<128x16xf32, #tpu.memory_space<vmem>>, %arg2: memref<128x16xf32, #tpu.memory_space<vmem>>, %arg3: memref<128x128xf32, #tpu.memory_space<vmem>>, %arg4: memref<128x1xf32, #tpu.memory_space<vmem>>, %arg5: memref<2x16xf32, #tpu.memory_space<vmem>>) attributes {dimension_semantics = [#tpu.dimension_semantics<parallel>], iteration_bounds = array<i64: 1>, scalar_prefetch = 0 : i64, scratch_operands = 0 : i64, tpu.core_type = #tpu.core_type<tc>, window_params = [{transform_indices = @transform_0, window_bounds = array<i64: 128, 16>}, {transform_indices = @transform_1, window_bounds = array<i64: 128, 16>}, {pipeline_mode = #tpu.pipeline_mode<synchronous>, transform_indices = @transform_2, window_bounds = array<i64: 128, 128>}, {pipeline_mode = #tpu.pipeline_mode<synchronous>, transform_indices = @transform_3, window_bounds = array<i64: 128, 1>}, {transform_indices = @transform_4, window_bounds = array<i64: 2, 16>}]} {
    %c0 = arith.constant 0 : index
    %c0_0 = arith.constant 0 : index
    %0 = vector.load %arg3[%c0, %c0_0] : memref<128x128xf32, #tpu.memory_space<vmem>>, vector<128x128xf32>
    %c0_1 = arith.constant 0 : index
    %c0_2 = arith.constant 0 : index
    %1 = vector.load %arg2[%c0_1, %c0_2] : memref<128x16xf32, #tpu.memory_space<vmem>>, vector<128x16xf32>
    %cst = arith.constant dense<0.000000e+00> : vector<128x16xf32>
    %2 = tpu.matmul %0, %1, %cst {dimension_numbers = #tpu.dot_dimension_numbers<[1], [0], [0], [1], [0, 0, 1, 1], [], []>} : vector<128x128xf32>, vector<128x16xf32>, vector<128x16xf32> -> vector<128x16xf32>
    %c0_3 = arith.constant 0 : index
    %c0_4 = arith.constant 0 : index
    %3 = vector.load %arg4[%c0_3, %c0_4] : memref<128x1xf32, #tpu.memory_space<vmem>>, vector<128x1xf32>
    %c0_5 = arith.constant 0 : index
    %c0_6 = arith.constant 0 : index
    %4 = vector.load %arg1[%c0_5, %c0_6] : memref<128x16xf32, #tpu.memory_space<vmem>>, vector<128x16xf32>
    %5 = arith.subf %4, %2 : vector<128x16xf32>
    %6 = math.absf %5 : vector<128x16xf32>
    %7 = vector.broadcast %3 : vector<128x1xf32> to vector<128x16xf32>
    %8 = arith.subf %6, %7 : vector<128x16xf32>
    %cst_7 = arith.constant 0.000000e+00 : f32
    %9 = vector.broadcast %cst_7 : f32 to vector<128x16xf32>
    %10 = arith.maximumf %8, %9 : vector<128x16xf32>
    %11 = vector.broadcast %3 : vector<128x1xf32> to vector<128x16xf32>
    %12 = arith.minimumf %6, %11 : vector<128x16xf32>
    %cst_8 = arith.constant dense<0.000000e+00> : vector<16xf32>
    %13 = vector.multi_reduction <add>, %10, %cst_8 [0] : vector<128x16xf32> to vector<16xf32>
    %14 = vector.shape_cast %13 : vector<16xf32> to vector<1x16xf32>
    %cst_9 = arith.constant dense<0.000000e+00> : vector<16xf32>
    %15 = vector.multi_reduction <add>, %12, %cst_9 [0] : vector<128x16xf32> to vector<16xf32>
    %16 = vector.shape_cast %15 : vector<16xf32> to vector<1x16xf32>
    %cst_10 = arith.constant 2.000000e-02 : f32
    %17 = vector.broadcast %cst_10 : f32 to vector<1x16xf32>
    %18 = arith.mulf %17, %16 : vector<1x16xf32>
    %19 = arith.addf %14, %18 : vector<1x16xf32>
    %cst_11 = arith.constant 0.000000e+00 : f32
    %20 = vector.broadcast %cst_11 : f32 to vector<1x16xf32>
    %21 = arith.cmpf oeq, %14, %20 : vector<1x16xf32>
    %22 = arith.extui %21 : vector<1x16xi1> to vector<1x16xi32>
    %23 = arith.sitofp %22 : vector<1x16xi32> to vector<1x16xf32>
    %c0_12 = arith.constant 0 : index
    %c0_13 = arith.constant 0 : index
    %24 = vector.load %arg5[%c0_12, %c0_13] : memref<2x16xf32, #tpu.memory_space<vmem>>, vector<1x16xf32>
    tpu.vector_store %arg5[%c0_12, %c0_13], %19 {strides = array<i32>} : memref<2x16xf32, #tpu.memory_space<vmem>>, vector<1x16xf32>,
    %c1 = arith.constant 1 : index
    %c0_14 = arith.constant 0 : index
    %25 = vector.load %arg5[%c1, %c0_14] : memref<2x16xf32, #tpu.memory_space<vmem>>, vector<1x16xf32>
    tpu.vector_store %arg5[%c1, %c0_14], %23 {strides = array<i32>} : memref<2x16xf32, #tpu.memory_space<vmem>>, vector<1x16xf32>,
    return
  }
  func.func @transform_0(%arg0: i32) -> (i32, i32) {
    %c0_i32 = arith.constant 0 : i32
    %c0_i32_0 = arith.constant 0 : i32
    return %c0_i32, %arg0 : i32, i32
  }
  func.func @transform_1(%arg0: i32) -> (i32, i32) {
    %c0_i32 = arith.constant 0 : i32
    %c0_i32_0 = arith.constant 0 : i32
    return %c0_i32, %arg0 : i32, i32
  }
  func.func @transform_2(%arg0: i32) -> (i32, i32) {
    %c0_i32 = arith.constant 0 : i32
    %c0_i32_0 = arith.constant 0 : i32
    %c0_i32_1 = arith.constant 0 : i32
    return %c0_i32, %c0_i32_0 : i32, i32
  }
  func.func @transform_3(%arg0: i32) -> (i32, i32) {
    %c0_i32 = arith.constant 0 : i32
    %c0_i32_0 = arith.constant 0 : i32
    %c0_i32_1 = arith.constant 0 : i32
    return %c0_i32, %c0_i32_0 : i32, i32
  }
  func.func @transform_4(%arg0: i32) -> (i32, i32) {
    %c0_i32 = arith.constant 0 : i32
    %c0_i32_0 = arith.constant 0 : i32
    return %c0_i32, %arg0 : i32, i32
  }
}

</mosaic_0001>

<llo_original>
// kernel: tpu_custom_call.1
$region0: #{tpu_custom_call.1}
  #allocation0 [shape = 'u32[]', space=smem, size = 0x4, offset = 0x4, fixed_abs, tag = 'smem constant byte address 0x4 - core index']
  #allocation1 [shape = 'u32[72,128]{1,0:T(1,128)}', space=vmem, size = 0x9000, scoped, tag = 'internal scratch']
  %s0 = inlined_call_operand.vmem [shape: f32[128,16], index: 0, kind: input, shape index: {}]
  %s1 = inlined_call_operand.vmem [shape: f32[128,16], index: 1, kind: input, shape index: {}]
  %s2 = inlined_call_operand.vmem [shape: f32[128,128], index: 2, kind: input, shape index: {}]
  %s3 = inlined_call_operand.vmem [shape: f32[128,1], index: 3, kind: input, shape index: {}]
  %s4 = inlined_call_operand.hbm [shape: f32[2,16], index: 4, kind: output, shape index: {}]
  %s5 = sld [smem:[#allocation0]]
  $region26: #{tpu_custom_call.1} parent=0
    _
  %s7 = ssub.s32 1, %s5
  %s8 = scalar_select 0, %s7, %s5
  $region1: #{tpu_custom_call.1} parent=0
    #allocation2 [shape = 'u8[1024]{0}', space=vmem, size = 0x400, scoped, tag = 'output window, operand 0, single buffered']
    #allocation3 [shape = 's32[1]{0}', space=sflag, size = 0x4, scoped, tag = 'scoped memory for tpu_custom_call.1']
    %9 = vsyncpa [#allocation3], 0
    // Predicated region
    $region2: #{tpu_custom_call.1} parent=1 // pred_check
      _
    $region3: #{tpu_custom_call.1} parent=1 // pred_check_branch
      %11 = sbr.rel (0) target = $region5
    $region4: #{tpu_custom_call.1} parent=1 // pred_region
      _
    $region5: #{tpu_custom_call.1} parent=1 // pred_fallthru
      _
    // Predicated region
    $region6: #{tpu_custom_call.1} parent=1 // pred_check
      _
    $region7: #{tpu_custom_call.1} parent=1 // pred_check_branch
      %13 = sbr.rel (0) target = $region9
    $region8: #{tpu_custom_call.1} parent=1 // pred_region
      _
    $region9: #{tpu_custom_call.1} parent=1 // pred_fallthru
      _
    // Predicated region
    $region10: #{tpu_custom_call.1} parent=1 // pred_check
      _
    $region11: #{tpu_custom_call.1} parent=1 // pred_check_branch
      %15 = sbr.rel (0) target = $region13
    $region12: #{tpu_custom_call.1} parent=1 // pred_region
      _
    $region13: #{tpu_custom_call.1} parent=1 // pred_fallthru
      _
    // Predicated region
    $region14: #{tpu_custom_call.1} parent=1 // pred_check
      _
    $region15: #{tpu_custom_call.1} parent=1 // pred_check_branch
      %17 = sbr.rel (0) target = $region17
    $region16: #{tpu_custom_call.1} parent=1 // pred_region
      _
    $region17: #{tpu_custom_call.1} parent=1 // pred_fallthru
      _
    %v18 = vld [vmem:[%s2] sm:$0xff]
    %v19 = vld [vmem:[%s2 + $0x8] sm:$0xff]
    %v20 = vld [vmem:[%s2 + $0x10] sm:$0xff]
    %v21 = vld [vmem:[%s2 + $0x18] sm:$0xff]
    %v22 = vld [vmem:[%s2 + $0x20] sm:$0xff]
    %v23 = vld [vmem:[%s2 + $0x28] sm:$0xff]
    %v24 = vld [vmem:[%s2 + $0x30] sm:$0xff]
    %v25 = vld [vmem:[%s2 + $0x38] sm:$0xff]
    %v26 = vld [vmem:[%s2 + $0x40] sm:$0xff]
    %v27 = vld [vmem:[%s2 + $0x48] sm:$0xff]
    %v28 = vld [vmem:[%s2 + $0x50] sm:$0xff]
    %v29 = vld [vmem:[%s2 + $0x58] sm:$0xff]
    %v30 = vld [vmem:[%s2 + $0x60] sm:$0xff]
    %v31 = vld [vmem:[%s2 + $0x68] sm:$0xff]
    %v32 = vld [vmem:[%s2 + $0x70] sm:$0xff]
    %v33 = vld [vmem:[%s2 + $0x78] sm:$0xff]
    %v34 = vld [vmem:[%s1] sm:$0xff]
    %v35 = vld [vmem:[%s1 + $0x8] sm:$0xff]
    %v36 = vld [vmem:[%s1 + $0x10] sm:$0xff]
    %v37 = vld [vmem:[%s1 + $0x18] sm:$0xff]
    %v38 = vld [vmem:[%s1 + $0x20] sm:$0xff]
    %v39 = vld [vmem:[%s1 + $0x28] sm:$0xff]
    %v40 = vld [vmem:[%s1 + $0x30] sm:$0xff]
    %v41 = vld [vmem:[%s1 + $0x38] sm:$0xff]
    %v42 = vld [vmem:[%s1 + $0x40] sm:$0xff]
    %v43 = vld [vmem:[%s1 + $0x48] sm:$0xff]
    %v44 = vld [vmem:[%s1 + $0x50] sm:$0xff]
    %v45 = vld [vmem:[%s1 + $0x58] sm:$0xff]
    %v46 = vld [vmem:[%s1 + $0x60] sm:$0xff]
    %v47 = vld [vmem:[%s1 + $0x68] sm:$0xff]
    %v48 = vld [vmem:[%s1 + $0x70] sm:$0xff]
    %v49 = vld [vmem:[%s1 + $0x78] sm:$0xff]
    %50 = vmatpush.msra.mxu0 %v49
    %51 = vmatpush.msra.mxu0 %v48
    %52 = vmatpush.msra.mxu0 %v47
    %53 = vmatpush.msra.mxu0 %v46
    %54 = vmatpush.msra.mxu0 %v45
    %55 = vmatpush.msra.mxu0 %v44
    %56 = vmatpush.msra.mxu0 %v43
    %57 = vmatpush.msra.mxu0 %v42
    %58 = vmatpush.msra.mxu0 %v41
    %59 = vmatpush.msra.mxu0 %v40
    %60 = vmatpush.msra.mxu0 %v39
    %61 = vmatpush.msra.mxu0 %v38
    %62 = vmatpush.msra.mxu0 %v37
    %63 = vmatpush.msra.mxu0 %v36
    %64 = vmatpush.msra.mxu0 %v35
    %65 = vmatpush.msra.mxu0 %v34
    %66 = vmatmul.f32.gmra.mxu0 %v18
    %v67 = vpop.f32.mrf.mxu0
    %v68 = vadd.f32 0.0, %v67
    %69 = vmatmul.f32.gmra.mxu0 %v19
    %v70 = vpop.f32.mrf.mxu0
    %v71 = vadd.f32 0.0, %v70
    %72 = vmatmul.f32.gmra.mxu0 %v20
    %v73 = vpop.f32.mrf.mxu0
    %v74 = vadd.f32 0.0, %v73
    %75 = vmatmul.f32.gmra.mxu0 %v21
    %v76 = vpop.f32.mrf.mxu0
    %v77 = vadd.f32 0.0, %v76
    %78 = vmatmul.f32.gmra.mxu0 %v22
    %v79 = vpop.f32.mrf.mxu0
    %v80 = vadd.f32 0.0, %v79
    %81 = vmatmul.f32.gmra.mxu0 %v23
    %v82 = vpop.f32.mrf.mxu0
    %v83 = vadd.f32 0.0, %v82
    %84 = vmatmul.f32.gmra.mxu0 %v24
    %v85 = vpop.f32.mrf.mxu0
    %v86 = vadd.f32 0.0, %v85
    %87 = vmatmul.f32.gmra.mxu0 %v25
    %v88 = vpop.f32.mrf.mxu0
    %v89 = vadd.f32 0.0, %v88
    %90 = vmatmul.f32.gmra.mxu0 %v26
    %v91 = vpop.f32.mrf.mxu0
    %v92 = vadd.f32 0.0, %v91
    %93 = vmatmul.f32.gmra.mxu0 %v27
    %v94 = vpop.f32.mrf.mxu0
    %v95 = vadd.f32 0.0, %v94
    %96 = vmatmul.f32.gmra.mxu0 %v28
    %v97 = vpop.f32.mrf.mxu0
    %v98 = vadd.f32 0.0, %v97
    %99 = vmatmul.f32.gmra.mxu0 %v29
    %v100 = vpop.f32.mrf.mxu0
    %v101 = vadd.f32 0.0, %v100
    %102 = vmatmul.f32.gmra.mxu0 %v30
    %v103 = vpop.f32.mrf.mxu0
    %v104 = vadd.f32 0.0, %v103
    %105 = vmatmul.f32.gmra.mxu0 %v31
    %v106 = vpop.f32.mrf.mxu0
    %v107 = vadd.f32 0.0, %v106
    %108 = vmatmul.f32.gmra.mxu0 %v32
    %v109 = vpop.f32.mrf.mxu0
    %v110 = vadd.f32 0.0, %v109
    %111 = vmatmul.f32.gmra.mxu0 %v33
    %v112 = vpop.f32.mrf.mxu0
    %v113 = vadd.f32 0.0, %v112
    %114 = vdwg.mxu0
    %v115 = vld [vmem:[%s3] sm:$0xff]
    %v116 = vld [vmem:[%s3 + $0x8] sm:$0xff]
    %v117 = vld [vmem:[%s3 + $0x10] sm:$0xff]
    %v118 = vld [vmem:[%s3 + $0x18] sm:$0xff]
    %v119 = vld [vmem:[%s3 + $0x20] sm:$0xff]
    %v120 = vld [vmem:[%s3 + $0x28] sm:$0xff]
    %v121 = vld [vmem:[%s3 + $0x30] sm:$0xff]
    %v122 = vld [vmem:[%s3 + $0x38] sm:$0xff]
    %v123 = vld [vmem:[%s3 + $0x40] sm:$0xff]
    %v124 = vld [vmem:[%s3 + $0x48] sm:$0xff]
    %v125 = vld [vmem:[%s3 + $0x50] sm:$0xff]
    %v126 = vld [vmem:[%s3 + $0x58] sm:$0xff]
    %v127 = vld [vmem:[%s3 + $0x60] sm:$0xff]
    %v128 = vld [vmem:[%s3 + $0x68] sm:$0xff]
    %v129 = vld [vmem:[%s3 + $0x70] sm:$0xff]
    %v130 = vld [vmem:[%s3 + $0x78] sm:$0xff]
    %v131 = vld [vmem:[%s0] sm:$0xff]
    %v132 = vld [vmem:[%s0 + $0x8] sm:$0xff]
    %v133 = vld [vmem:[%s0 + $0x10] sm:$0xff]
    %v134 = vld [vmem:[%s0 + $0x18] sm:$0xff]
    %v135 = vld [vmem:[%s0 + $0x20] sm:$0xff]
    %v136 = vld [vmem:[%s0 + $0x28] sm:$0xff]
    %v137 = vld [vmem:[%s0 + $0x30] sm:$0xff]
    %v138 = vld [vmem:[%s0 + $0x38] sm:$0xff]
    %v139 = vld [vmem:[%s0 + $0x40] sm:$0xff]
    %v140 = vld [vmem:[%s0 + $0x48] sm:$0xff]
    %v141 = vld [vmem:[%s0 + $0x50] sm:$0xff]
    %v142 = vld [vmem:[%s0 + $0x58] sm:$0xff]
    %v143 = vld [vmem:[%s0 + $0x60] sm:$0xff]
    %v144 = vld [vmem:[%s0 + $0x68] sm:$0xff]
    %v145 = vld [vmem:[%s0 + $0x70] sm:$0xff]
    %v146 = vld [vmem:[%s0 + $0x78] sm:$0xff]
    %v147 = vsub.f32 %v131, %v68
    %v148 = vsub.f32 %v132, %v71
    %v149 = vsub.f32 %v133, %v74
    %v150 = vsub.f32 %v134, %v77
    %v151 = vsub.f32 %v135, %v80
    %v152 = vsub.f32 %v136, %v83
    %v153 = vsub.f32 %v137, %v86
    %v154 = vsub.f32 %v138, %v89
    %v155 = vsub.f32 %v139, %v92
    %v156 = vsub.f32 %v140, %v95
    %v157 = vsub.f32 %v141, %v98
    %v158 = vsub.f32 %v142, %v101
    %v159 = vsub.f32 %v143, %v104
    %v160 = vsub.f32 %v144, %v107
    %v161 = vsub.f32 %v145, %v110
    %v162 = vsub.f32 %v146, %v113
    %v163 = vand.u32 2147483647, %v147
    %v164 = vand.u32 2147483647, %v148
    %v165 = vand.u32 2147483647, %v149
    %v166 = vand.u32 2147483647, %v150
    %v167 = vand.u32 2147483647, %v151
    %v168 = vand.u32 2147483647, %v152
    %v169 = vand.u32 2147483647, %v153
    %v170 = vand.u32 2147483647, %v154
    %v171 = vand.u32 2147483647, %v155
    %v172 = vand.u32 2147483647, %v156
    %v173 = vand.u32 2147483647, %v157
    %v174 = vand.u32 2147483647, %v158
    %v175 = vand.u32 2147483647, %v159
    %v176 = vand.u32 2147483647, %v160
    %v177 = vand.u32 2147483647, %v161
    %v178 = vand.u32 2147483647, %v162
    %180 = vset.pattern.permute.xlu0 0
    %181 = vperm.xlu0 %180, %v115
    %v182 = vpop.permute.xlu0 %181
    %185 = vset.pattern.permute.xlu0 0
    %186 = vperm.xlu0 %185, %v116
    %v187 = vpop.permute.xlu0 %186
    %190 = vset.pattern.permute.xlu0 0
    %191 = vperm.xlu0 %190, %v117
    %v192 = vpop.permute.xlu0 %191
    %195 = vset.pattern.permute.xlu0 0
    %196 = vperm.xlu0 %195, %v118
    %v197 = vpop.permute.xlu0 %196
    %200 = vset.pattern.permute.xlu0 0
    %201 = vperm.xlu0 %200, %v119
    %v202 = vpop.permute.xlu0 %201
    %205 = vset.pattern.permute.xlu0 0
    %206 = vperm.xlu0 %205, %v120
    %v207 = vpop.permute.xlu0 %206
    %210 = vset.pattern.permute.xlu0 0
    %211 = vperm.xlu0 %210, %v121
    %v212 = vpop.permute.xlu0 %211
    %215 = vset.pattern.permute.xlu0 0
    %216 = vperm.xlu0 %215, %v122
    %v217 = vpop.permute.xlu0 %216
    %220 = vset.pattern.permute.xlu0 0
    %221 = vperm.xlu0 %220, %v123
    %v222 = vpop.permute.xlu0 %221
    %225 = vset.pattern.permute.xlu0 0
    %226 = vperm.xlu0 %225, %v124
    %v227 = vpop.permute.xlu0 %226
    %230 = vset.pattern.permute.xlu0 0
    %231 = vperm.xlu0 %230, %v125
    %v232 = vpop.permute.xlu0 %231
    %235 = vset.pattern.permute.xlu0 0
    %236 = vperm.xlu0 %235, %v126
    %v237 = vpop.permute.xlu0 %236
    %240 = vset.pattern.permute.xlu0 0
    %241 = vperm.xlu0 %240, %v127
    %v242 = vpop.permute.xlu0 %241
    %245 = vset.pattern.permute.xlu0 0
    %246 = vperm.xlu0 %245, %v128
    %v247 = vpop.permute.xlu0 %246
    %250 = vset.pattern.permute.xlu0 0
    %251 = vperm.xlu0 %250, %v129
    %v252 = vpop.permute.xlu0 %251
    %255 = vset.pattern.permute.xlu0 0
    %256 = vperm.xlu0 %255, %v130
    %v257 = vpop.permute.xlu0 %256
    %v259 = vsub.f32 %v163, %v182
    %v260 = vsub.f32 %v164, %v187
    %v261 = vsub.f32 %v165, %v192
    %v262 = vsub.f32 %v166, %v197
    %v263 = vsub.f32 %v167, %v202
    %v264 = vsub.f32 %v168, %v207
    %v265 = vsub.f32 %v169, %v212
    %v266 = vsub.f32 %v170, %v217
    %v267 = vsub.f32 %v171, %v222
    %v268 = vsub.f32 %v172, %v227
    %v269 = vsub.f32 %v173, %v232
    %v270 = vsub.f32 %v174, %v237
    %v271 = vsub.f32 %v175, %v242
    %v272 = vsub.f32 %v176, %v247
    %v273 = vsub.f32 %v177, %v252
    %v274 = vsub.f32 %v178, %v257
    %v275 = vmax.f32 %v259, 0.0
    %v276 = vmax.f32 %v260, 0.0
    %v277 = vmax.f32 %v261, 0.0
    %v278 = vmax.f32 %v262, 0.0
    %v279 = vmax.f32 %v263, 0.0
    %v280 = vmax.f32 %v264, 0.0
    %v281 = vmax.f32 %v265, 0.0
    %v282 = vmax.f32 %v266, 0.0
    %v283 = vmax.f32 %v267, 0.0
    %v284 = vmax.f32 %v268, 0.0
    %v285 = vmax.f32 %v269, 0.0
    %v286 = vmax.f32 %v270, 0.0
    %v287 = vmax.f32 %v271, 0.0
    %v288 = vmax.f32 %v272, 0.0
    %v289 = vmax.f32 %v273, 0.0
    %v290 = vmax.f32 %v274, 0.0
    %v291 = vmin.f32 %v163, %v182
    %v292 = vmin.f32 %v164, %v187
    %v293 = vmin.f32 %v165, %v192
    %v294 = vmin.f32 %v166, %v197
    %v295 = vmin.f32 %v167, %v202
    %v296 = vmin.f32 %v168, %v207
    %v297 = vmin.f32 %v169, %v212
    %v298 = vmin.f32 %v170, %v217
    %v299 = vmin.f32 %v171, %v222
    %v300 = vmin.f32 %v172, %v227
    %v301 = vmin.f32 %v173, %v232
    %v302 = vmin.f32 %v174, %v237
    %v303 = vmin.f32 %v175, %v242
    %v304 = vmin.f32 %v176, %v247
    %v305 = vmin.f32 %v177, %v252
    %v306 = vmin.f32 %v178, %v257
    %vm307 = vcmask 130048
    %v308 = vsel %vm307, %v275, 0.0
    %v309 = vsel %vm307, %v276, 0.0
    %v310 = vadd.f32 %v308, %v309
    %v311 = vsel %vm307, %v277, 0.0
    %v312 = vadd.f32 %v310, %v311
    %v313 = vsel %vm307, %v278, 0.0
    %v314 = vadd.f32 %v312, %v313
    %v315 = vsel %vm307, %v279, 0.0
    %v316 = vadd.f32 %v314, %v315
    %v317 = vsel %vm307, %v280, 0.0
    %v318 = vadd.f32 %v316, %v317
    %v319 = vsel %vm307, %v281, 0.0
    %v320 = vadd.f32 %v318, %v319
    %v321 = vsel %vm307, %v282, 0.0
    %v322 = vadd.f32 %v320, %v321
    %v323 = vsel %vm307, %v283, 0.0
    %v324 = vadd.f32 %v322, %v323
    %v325 = vsel %vm307, %v284, 0.0
    %v326 = vadd.f32 %v324, %v325
    %v327 = vsel %vm307, %v285, 0.0
    %v328 = vadd.f32 %v326, %v327
    %v329 = vsel %vm307, %v286, 0.0
    %v330 = vadd.f32 %v328, %v329
    %v331 = vsel %vm307, %v287, 0.0
    %v332 = vadd.f32 %v330, %v331
    %v333 = vsel %vm307, %v288, 0.0
    %v334 = vadd.f32 %v332, %v333
    %v335 = vsel %vm307, %v289, 0.0
    %v336 = vadd.f32 %v334, %v335
    %v337 = vsel %vm307, %v290, 0.0
    %v338 = vadd.f32 %v336, %v337
    %v339 = vrot.slane %v338, 4
    %v340 = vadd.f32 %v338, %v339
    %v341 = vrot.slane %v340, 2
    %v342 = vadd.f32 %v340, %v341
    %v343 = vrot.slane %v342, 1
    %v344 = vadd.f32 %v342, %v343
    %v345 = vsel %vm307, %v291, 0.0
    %v346 = vsel %vm307, %v292, 0.0
    %v347 = vadd.f32 %v345, %v346
    %v348 = vsel %vm307, %v293, 0.0
    %v349 = vadd.f32 %v347, %v348
    %v350 = vsel %vm307, %v294, 0.0
    %v351 = vadd.f32 %v349, %v350
    %v352 = vsel %vm307, %v295, 0.0
    %v353 = vadd.f32 %v351, %v352
    %v354 = vsel %vm307, %v296, 0.0
    %v355 = vadd.f32 %v353, %v354
    %v356 = vsel %vm307, %v297, 0.0
    %v357 = vadd.f32 %v355, %v356
    %v358 = vsel %vm307, %v298, 0.0
    %v359 = vadd.f32 %v357, %v358
    %v360 = vsel %vm307, %v299, 0.0
    %v361 = vadd.f32 %v359, %v360
    %v362 = vsel %vm307, %v300, 0.0
    %v363 = vadd.f32 %v361, %v362
    %v364 = vsel %vm307, %v301, 0.0
    %v365 = vadd.f32 %v363, %v364
    %v366 = vsel %vm307, %v302, 0.0
    %v367 = vadd.f32 %v365, %v366
    %v368 = vsel %vm307, %v303, 0.0
    %v369 = vadd.f32 %v367, %v368
    %v370 = vsel %vm307, %v304, 0.0
    %v371 = vadd.f32 %v369, %v370
    %v372 = vsel %vm307, %v305, 0.0
    %v373 = vadd.f32 %v371, %v372
    %v374 = vsel %vm307, %v306, 0.0
    %v375 = vadd.f32 %v373, %v374
    %v376 = vrot.slane %v375, 4
    %v377 = vadd.f32 %v375, %v376
    %v378 = vrot.slane %v377, 2
    %v379 = vadd.f32 %v377, %v378
    %v380 = vrot.slane %v379, 1
    %v381 = vadd.f32 %v379, %v380
    %v382 = vmul.f32 %v381, 0.02
    %v383 = vadd.f32 %v344, %v382
    %vm384 = vcmp.eq.f32.partialorder %v344, 0.0
    %v385 = vsel %vm384, 1, 0
    %v386 = vcvt.s32.f32 %v385
    %vm387 = vcmask 122880
    %388 = vst.msk [vmem:[#allocation2] sm:$0x1] %vm387, %v383
    %389 = vst.msk [vmem:[#allocation2 + $0x1] sm:$0x1] %vm387, %v386
    // Predicated region
    $region18: #{tpu_custom_call.1} parent=1 // pred_check
      _
    $region19: #{tpu_custom_call.1} parent=1 // pred_check_branch
      %391 = sbr.rel (0) target = $region21
    $region20: #{tpu_custom_call.1} parent=1 // pred_region
      %393 = vsyncadd [#allocation3], 0
      %s395 = sshll.u32 [#allocation2], 4
      %s396 = int_to_ptr.vmem [resolvable:$true] %s395
      %s397 = sshll.u32 %s4, 4
      %s398 = int_to_ptr.hbm [resolvable:$true] %s397
      %400 = dma.vmem_to_hbm [thread:$0]  %s396, 32, %s398, [#allocation3]
    $region21: #{tpu_custom_call.1} parent=1 // pred_fallthru
      _
    // Predicated region
    $region22: #{tpu_custom_call.1} parent=1 // pred_check
      _
    $region23: #{tpu_custom_call.1} parent=1 // pred_check_branch
      %402 = sbr.rel (0) target = $region25
    $region24: #{tpu_custom_call.1} parent=1 // pred_region
      %404 = dma.done [#allocation3], 32
    $region25: #{tpu_custom_call.1} parent=1 // pred_fallthru
      _
    %405 = vsyncpa [#allocation3], 1

</llo_original>
